<compile_context>
chip_gen: v6e
topology: v6e:2x2x1
jax: 0.10.0
libtpu: 0.0.40
codegen_flags: <defaults>
</compile_context>

<pallas_src>
import functools

import jax
import jax.numpy as jnp
from jax import lax
from jax.experimental import pallas as pl
from jax.experimental.pallas import tpu as pltpu


def _silu(z):
    return z * jax.nn.sigmoid(z)


def expert_kernel(
    x_ref,        # (TS, D)  fp32   current sequence-row tile
    w_ug_ref,     # (D, 2H)  bf16   fused [up | gate]
    b_ug_ref,     # (1, 2H)  fp32
    w_pre_ref,    # (D, A)   bf16
    b_pre_ref,    # (1, A)   fp32
    w_post_ref,   # (H, A)   bf16
    b_post_ref,   # (1, A)   fp32
    ln_g_ref,     # (1, A)   fp32
    ln_b_ref,     # (1, A)   fp32
    w_proj_ref,   # (A, H)   bf16
    w_down_ref,   # (H, D)   bf16
    b_down_ref,   # (1, D)   fp32
    o_ref,        # (TS, D)
    ain_sc,       # (S, A)   fp32 scratch: LayerNorm'd adapt_in, full sequence
    aout_sc,      # (S, A)   fp32 scratch: LayerNorm'd adapt_out, full sequence
    *, ts,
):
    p = pl.program_id(1)   # phase: 0 = adapt pre-pass, 1 = main pass
    t = pl.program_id(2)   # sequence-row tile index

    x16 = x_ref[...].astype(jnp.bfloat16)   # bf16 MXU inputs, fp32 accumulation

    # fused shared_up / shared_gate -> SwiGLU-style hidden.
    # Recomputed in both phases: cheaper than holding (S, H) fp32 hidden resident.
    ug = jnp.dot(x16, w_ug_ref[...], preferred_element_type=jnp.float32) + b_ug_ref[...]
    H = ug.shape[-1] // 2
    # NOTE: for real configs H = 2*n_embd is a multiple of 256, so this lane
    # split is tile-aligned (free); only the toy config pays a masked copy.
    up = ug[:, :H]
    gate = ug[:, H:]
    hidden = _silu(gate) * up                                   # (TS, H) fp32

    gamma = ln_g_ref[...]
    beta = ln_b_ref[...]

    def layer_norm(z):
        # two-pass mean/variance (robust to non-zero-mean activations)
        mean = jnp.mean(z, axis=-1, keepdims=True)
        d = z - mean
        var = jnp.mean(d * d, axis=-1, keepdims=True)
        return d * lax.rsqrt(var + 1e-5) * gamma + beta

    row0 = pl.multiple_of(t * ts, ts)

    @pl.when(p == 0)
    def _pre_pass():
        adapt_in = layer_norm(
            jnp.dot(x16, w_pre_ref[...], preferred_element_type=jnp.float32)
            + b_pre_ref[...])                                   # (TS, A)
        adapt_out = layer_norm(
            jnp.dot(hidden.astype(jnp.bfloat16), w_post_ref[...],
                    preferred_element_type=jnp.float32)
            + b_post_ref[...])                                  # (TS, A)
        ain_sc[pl.ds(row0, ts), :] = adapt_in
        aout_sc[pl.ds(row0, ts), :] = adapt_out

    @pl.when(p == 1)
    def _main_pass():
        ain_blk = ain_sc[pl.ds(row0, ts), :].astype(jnp.bfloat16)    # (TS, A)
        ain_all = ain_sc[...].astype(jnp.bfloat16)                   # (S, A)
        aout_all = aout_sc[...].astype(jnp.bfloat16)                 # (S, A)

        # adapt_in_blk @ adapt_out^T: contract on A, no materialized transpose.
        adapt_w = lax.dot_general(
            ain_blk, aout_all,
            dimension_numbers=(((1,), (1,)), ((), ())),
            preferred_element_type=jnp.float32,
        )                                                            # (TS, S)
        adapt_w = _silu(jnp.clip(adapt_w, -5.0, 5.0)).astype(jnp.bfloat16)

        adapt = jnp.dot(adapt_w, ain_all,
                        preferred_element_type=jnp.float32)          # (TS, A)
        adapt = jnp.dot(adapt.astype(jnp.bfloat16), w_proj_ref[...],
                        preferred_element_type=jnp.float32)          # (TS, H)
        h = hidden + 0.1 * adapt

        # shared_down (+ dropout = identity in eval)
        out = jnp.dot(h.astype(jnp.bfloat16), w_down_ref[...],
                      preferred_element_type=jnp.float32) + b_down_ref[...]
        o_ref[...] = out.astype(o_ref.dtype)


def _vmem_budget_bytes():
    """Generation-aware VMEM budget (~80% of physical, headroom for scratch/buffers)."""
    try:
        cap = int(pltpu.get_tpu_info().vmem_capacity_bytes)
    except Exception:
        cap = 128 << 20
    return max(int(cap * 0.8), 16 << 20)


def _pick_tile(S, D, H, A, weight_bytes, vmem_budget):
    """Largest MXU-friendly sequence tile dividing S that fits the VMEM budget."""
    ts = S
    for cand in (256, 128, 64, 32, 16, 8):   # prefer 256 for the 256-wide v6e/v7x MXU
        if cand <= S and S % cand == 0:
            ts = cand
            break

    def vmem_est(ts_):
        interm = 4 * (ts_ * 2 * H      # ug
                      + 2 * ts_ * H    # hidden + adapted hidden
                      + ts_ * S        # adapt_w
                      + ts_ * D)       # down output
        tiles = 2 * 2 * ts_ * D * 4    # double-buffered x / out tiles
        scratch = 2 * S * A * 4        # adapt_in / adapt_out full-sequence scratch
        return weight_bytes + interm + tiles + scratch

    while ts > 8 and vmem_est(ts) > vmem_budget and S % (ts // 2) == 0:
        ts //= 2
    return ts


def llada_expert_forward(x, params):
    """x: (B, S, D) float32. params: dict of weights (see init_params)."""
    B, S, D = x.shape
    H = params["w_down"].shape[0]
    A = params["w_pre"].shape[1]

    weights = (
        params["w_ug"], params["b_ug"],
        params["w_pre"], params["b_pre"],
        params["w_post"], params["b_post"],
        params["ln_gamma"], params["ln_beta"],
        params["w_proj"],
        params["w_down"], params["b_down"],
    )
    weight_bytes = sum(int(w.size) * w.dtype.itemsize for w in weights)

    vmem_budget = _vmem_budget_bytes()
    TS = _pick_tile(S, D, H, A, weight_bytes, vmem_budget)
    NT = S // TS

    # Grid-invariant weights: whole array resident in VMEM (single copy, no
    # per-step double-buffered refetch). TODO(synk): K-stream for very large D.
    vmem_resident = pl.BlockSpec(memory_space=pltpu.MemorySpace.VMEM)
    in_specs = [pl.BlockSpec((pl.Squeezed(), TS, D), lambda b, p, t: (b, t, 0))]
    in_specs += [vmem_resident] * len(weights)
    # Phase 0 never finalizes an output block: all phase-0 steps map to row-block 0,
    # which is only written back after phase 1 / t=0 has filled it with valid data.
    out_spec = pl.BlockSpec((pl.Squeezed(), TS, D), lambda b, p, t: (b, t * p, 0))

    interm_bytes = 4 * (TS * 2 * H + 2 * TS * H + TS * S + TS * D) + 2 * S * A * 4
    tile_bytes = 2 * 2 * TS * D * 4
    vmem_limit = int(min(max(2 * (weight_bytes + interm_bytes + tile_bytes), 32 << 20),
                         vmem_budget))

    # ug GEMM runs in both phases (recompute instead of caching (S, H) hidden).
    flops = 2 * B * S * (2 * (D * 2 * H) + D * A + H * A + 2 * S * A + A * H + H * D)
    transcendentals = B * (2 * S * H + S * S)
    bytes_accessed = (2 * int(x.size) * x.dtype.itemsize      # x read in both phases
                      + weight_bytes
                      + B * S * D * x.dtype.itemsize)

    fn = pl.pallas_call(
        functools.partial(expert_kernel, ts=TS),
        out_shape=jax.ShapeDtypeStruct((B, S, D), x.dtype),
        grid_spec=pltpu.PrefetchScalarGridSpec(
            num_scalar_prefetch=0,
            grid=(B, 2, NT),
            in_specs=in_specs,
            out_specs=out_spec,
            scratch_shapes=[
                pltpu.VMEM((S, A), jnp.float32),   # adapt_in  (post-LN)
                pltpu.VMEM((S, A), jnp.float32),   # adapt_out (post-LN)
            ],
        ),
        compiler_params=pltpu.CompilerParams(
            dimension_semantics=("parallel", "arbitrary", "arbitrary"),
            vmem_limit_bytes=vmem_limit,
        ),
        cost_estimate=pl.CostEstimate(
            flops=int(flops),
            transcendentals=int(transcendentals),
            bytes_accessed=int(bytes_accessed),
        ),
    )

    return fn(x, *weights)


def init_params(key, n_embd):
    """Deterministic init matching LLaDAExpert._init_weights (bias=True).

    Large matrices are stored in bfloat16 (autocast-equivalent); biases and
    LayerNorm params stay fp32. up|gate are pre-fused into one (D, 2H) weight.
    Weights are stored (in, out) == transpose of PyTorch nn.Linear weight (out, in).
    """
    D = n_embd
    H = 2 * D                 # hidden_dim
    A = H // 16               # adapt_dim
    scale = 1.0 / (D ** 0.5)
    adapt_scale = scale * 0.01

    ks = jax.random.split(key, 5)
    norm = lambda k, shp, s: (jax.random.normal(k, shp, jnp.float32) * s).astype(jnp.bfloat16)
    return {
        "w_ug":     norm(ks[0], (D, 2 * H), scale),     # fused [up | gate]
        "b_ug":     jnp.zeros((1, 2 * H), jnp.float32),
        "w_down":   norm(ks[1], (H, D), scale),
        "b_down":   jnp.zeros((1, D), jnp.float32),
        "w_pre":    norm(ks[2], (D, A), adapt_scale),
        "b_pre":    jnp.zeros((1, A), jnp.float32),
        "w_post":   norm(ks[3], (H, A), adapt_scale),
        "b_post":   jnp.zeros((1, A), jnp.float32),
        "w_proj":   norm(ks[4], (A, H), adapt_scale),
        "ln_gamma": jnp.ones((1, A), jnp.float32),
        "ln_beta":  jnp.zeros((1, A), jnp.float32),
    }


def reference_forward(x, params):
    """Pure-JAX reference with the same numerics as the kernel
    (bf16 GEMM inputs incl. the adaptation bmm path, fp32 accumulation)."""
    f32, bf16 = jnp.float32, jnp.bfloat16
    gamma, beta = params["ln_gamma"], params["ln_beta"]

    def ln(z):
        m = jnp.mean(z, axis=-1, keepdims=True)
        d = z - m
        v = jnp.mean(d * d, axis=-1, keepdims=True)
        return d * lax.rsqrt(v + 1e-5) * gamma + beta

    silu = lambda z: z * jax.nn.sigmoid(z)

    x16 = x.astype(bf16)
    ug = jnp.dot(x16, params["w_ug"], preferred_element_type=f32) + params["b_ug"]
    H = ug.shape[-1] // 2
    up, gate = ug[..., :H], ug[..., H:]
    hidden = silu(gate) * up
    adapt_in = ln(jnp.dot(x16, params["w_pre"], preferred_element_type=f32)
                  + params["b_pre"])
    adapt_out = ln(jnp.dot(hidden.astype(bf16), params["w_post"],
                           preferred_element_type=f32) + params["b_post"])
    ai16, ao16 = adapt_in.astype(bf16), adapt_out.astype(bf16)
    aw = jnp.einsum("bsa,bta->bst", ai16, ao16, preferred_element_type=f32)
    aw = silu(jnp.clip(aw, -5.0, 5.0)).astype(bf16)
    adapt = jnp.einsum("bst,bta->bsa", aw, ai16, preferred_element_type=f32)
    adapt = jnp.dot(adapt.astype(bf16), params["w_proj"], preferred_element_type=f32)
    hidden = hidden + 0.1 * adapt
    return jnp.dot(hidden.astype(bf16), params["w_down"],
                   preferred_element_type=f32) + params["b_down"]


if __name__ == "__main__":
    B, S, D = 2, 8, 32   # batch, seq, n_embd  -> hidden_dim=64, adapt_dim=4
    key = jax.random.PRNGKey(0)
    kx, kp = jax.random.split(key)
    x = jax.random.normal(kx, (B, S, D), jnp.float32)
    params = init_params(kp, D)

    out = jax.block_until_ready(llada_expert_forward(x, params))
    ref = reference_forward(x, params)

    assert out.shape == (B, S, D)
    max_err = float(jnp.max(jnp.abs(out - ref)))
    assert jnp.allclose(out, ref, atol=2e-2, rtol=2e-2), f"mismatch vs reference: {max_err}"

    print("KERNEL_OK")
</pallas_src>

<mosaic_0001>
module attributes {stable_mosaic.version = 11 : i64} {
  func.func @expert_kernel(%arg0: i32, %arg1: i32, %arg2: i32, %arg3: memref<1x8x32xf32, #tpu.memory_space<vmem>>, %arg4: memref<32x128xbf16, #tpu.memory_space<vmem>>, %arg5: memref<1x128xf32, #tpu.memory_space<vmem>>, %arg6: memref<32x4xbf16, #tpu.memory_space<vmem>>, %arg7: memref<1x4xf32, #tpu.memory_space<vmem>>, %arg8: memref<64x4xbf16, #tpu.memory_space<vmem>>, %arg9: memref<1x4xf32, #tpu.memory_space<vmem>>, %arg10: memref<1x4xf32, #tpu.memory_space<vmem>>, %arg11: memref<1x4xf32, #tpu.memory_space<vmem>>, %arg12: memref<4x64xbf16, #tpu.memory_space<vmem>>, %arg13: memref<64x32xbf16, #tpu.memory_space<vmem>>, %arg14: memref<1x32xf32, #tpu.memory_space<vmem>>, %arg15: memref<1x8x32xf32, #tpu.memory_space<vmem>>, %arg16: memref<8x4xf32, #tpu.memory_space<vmem>>, %arg17: memref<8x4xf32, #tpu.memory_space<vmem>>) attributes {dimension_semantics = [#tpu.dimension_semantics<parallel>, #tpu.dimension_semantics<arbitrary>, #tpu.dimension_semantics<arbitrary>], iteration_bounds = array<i64: 2, 2, 1>, scalar_prefetch = 0 : i64, scratch_operands = 2 : i64, tpu.core_type = #tpu.core_type<tc>, window_params = [{transform_indices = @transform_0, window_bounds = array<i64: 1, 8, 32>}, {pipeline_mode = #tpu.pipeline_mode<synchronous>, transform_indices = @transform_1, window_bounds = array<i64: 32, 128>}, {pipeline_mode = #tpu.pipeline_mode<synchronous>, transform_indices = @transform_2, window_bounds = array<i64: 1, 128>}, {pipeline_mode = #tpu.pipeline_mode<synchronous>, transform_indices = @transform_3, window_bounds = array<i64: 32, 4>}, {pipeline_mode = #tpu.pipeline_mode<synchronous>, transform_indices = @transform_4, window_bounds = array<i64: 1, 4>}, {pipeline_mode = #tpu.pipeline_mode<synchronous>, transform_indices = @transform_5, window_bounds = array<i64: 64, 4>}, {pipeline_mode = #tpu.pipeline_mode<synchronous>, transform_indices = @transform_6, window_bounds = array<i64: 1, 4>}, {pipeline_mode = #tpu.pipeline_mode<synchronous>, transform_indices = @transform_7, window_bounds = array<i64: 1, 4>}, {pipeline_mode = #tpu.pipeline_mode<synchronous>, transform_indices = @transform_8, window_bounds = array<i64: 1, 4>}, {pipeline_mode = #tpu.pipeline_mode<synchronous>, transform_indices = @transform_9, window_bounds = array<i64: 4, 64>}, {pipeline_mode = #tpu.pipeline_mode<synchronous>, transform_indices = @transform_10, window_bounds = array<i64: 64, 32>}, {pipeline_mode = #tpu.pipeline_mode<synchronous>, transform_indices = @transform_11, window_bounds = array<i64: 1, 32>}, {transform_indices = @transform_12, window_bounds = array<i64: 1, 8, 32>}]} {
    %c0 = arith.constant 0 : index
    %c0_0 = arith.constant 0 : index
    %c0_1 = arith.constant 0 : index
    %0 = vector.load %arg3[%c0, %c0_0, %c0_1] : memref<1x8x32xf32, #tpu.memory_space<vmem>>, vector<1x8x32xf32>
    %1 = vector.shape_cast %0 : vector<1x8x32xf32> to vector<8x32xf32>
    %2 = arith.truncf %1 : vector<8x32xf32> to vector<8x32xbf16>
    %c0_2 = arith.constant 0 : index
    %c0_3 = arith.constant 0 : index
    %3 = vector.load %arg4[%c0_2, %c0_3] : memref<32x128xbf16, #tpu.memory_space<vmem>>, vector<32x128xbf16>
    %cst = arith.constant dense<0.000000e+00> : vector<8x128xf32>
    %4 = tpu.matmul %2, %3, %cst {dimension_numbers = #tpu.dot_dimension_numbers<[1], [0], [0], [1], [0, 0, 1, 1], [], []>} : vector<8x32xbf16>, vector<32x128xbf16>, vector<8x128xf32> -> vector<8x128xf32>
    %c0_4 = arith.constant 0 : index
    %c0_5 = arith.constant 0 : index
    %5 = vector.load %arg5[%c0_4, %c0_5] : memref<1x128xf32, #tpu.memory_space<vmem>>, vector<1x128xf32>
    %6 = vector.broadcast %5 : vector<1x128xf32> to vector<8x128xf32>
    %7 = arith.addf %4, %6 : vector<8x128xf32>
    %8 = vector.extract_strided_slice %7 {offsets = [0, 0], sizes = [8, 64], strides = [1, 1]} : vector<8x128xf32> to vector<8x64xf32>
    %9 = vector.extract_strided_slice %7 {offsets = [0, 64], sizes = [8, 64], strides = [1, 1]} : vector<8x128xf32> to vector<8x64xf32>
    %10 = arith.negf %9 : vector<8x64xf32>
    %11 = math.exp %10 : vector<8x64xf32>
    %cst_6 = arith.constant 1.000000e+00 : f32
    %12 = vector.broadcast %cst_6 : f32 to vector<8x64xf32>
    %13 = arith.addf %12, %11 : vector<8x64xf32>
    %14 = arith.divf %12, %13 : vector<8x64xf32>
    %15 = arith.mulf %9, %14 : vector<8x64xf32>
    %16 = arith.mulf %15, %8 : vector<8x64xf32>
    %c0_7 = arith.constant 0 : index
    %c0_8 = arith.constant 0 : index
    %17 = vector.load %arg10[%c0_7, %c0_8] : memref<1x4xf32, #tpu.memory_space<vmem>>, vector<1x4xf32>
    %c0_9 = arith.constant 0 : index
    %c0_10 = arith.constant 0 : index
    %18 = vector.load %arg11[%c0_9, %c0_10] : memref<1x4xf32, #tpu.memory_space<vmem>>, vector<1x4xf32>
    %c8_i32 = arith.constant 8 : i32
    %19 = arith.muli %arg2, %c8_i32 : i32
    %20 = tpu.assume_multiple %19, 8 : i32
    %c0_i32 = arith.constant 0 : i32
    %21 = arith.cmpi eq, %arg1, %c0_i32 : i32
    %22 = arith.extui %21 : i1 to i32
    %c0_i32_11 = arith.constant 0 : i32
    %23 = arith.cmpi ne, %22, %c0_i32_11 : i32
    scf.if %23 {
      %c0_13 = arith.constant 0 : index
      %c0_14 = arith.constant 0 : index
      %27 = vector.load %arg6[%c0_13, %c0_14] : memref<32x4xbf16, #tpu.memory_space<vmem>>, vector<32x4xbf16>
      %cst_15 = arith.constant dense<0.000000e+00> : vector<8x4xf32>
      %28 = tpu.matmul %2, %27, %cst_15 {dimension_numbers = #tpu.dot_dimension_numbers<[1], [0], [0], [1], [0, 0, 1, 1], [], []>} : vector<8x32xbf16>, vector<32x4xbf16>, vector<8x4xf32> -> vector<8x4xf32>
      %c0_16 = arith.constant 0 : index
      %c0_17 = arith.constant 0 : index
      %29 = vector.load %arg7[%c0_16, %c0_17] : memref<1x4xf32, #tpu.memory_space<vmem>>, vector<1x4xf32>
      %30 = vector.broadcast %29 : vector<1x4xf32> to vector<8x4xf32>
      %31 = arith.addf %28, %30 : vector<8x4xf32>
      %cst_18 = arith.constant dense<0.000000e+00> : vector<8xf32>
      %32 = vector.multi_reduction <add>, %31, %cst_18 [1] : vector<8x4xf32> to vector<8xf32>
      %33 = vector.shape_cast %32 : vector<8xf32> to vector<8x1xf32>
      %cst_19 = arith.constant 4.000000e+00 : f32
      %34 = vector.broadcast %cst_19 : f32 to vector<8x1xf32>
      %35 = arith.divf %33, %34 : vector<8x1xf32>
      %36 = vector.broadcast %35 : vector<8x1xf32> to vector<8x4xf32>
      %37 = arith.subf %31, %36 : vector<8x4xf32>
      %38 = arith.mulf %37, %37 : vector<8x4xf32>
      %cst_20 = arith.constant dense<0.000000e+00> : vector<8xf32>
      %39 = vector.multi_reduction <add>, %38, %cst_20 [1] : vector<8x4xf32> to vector<8xf32>
      %40 = vector.shape_cast %39 : vector<8xf32> to vector<8x1xf32>
      %cst_21 = arith.constant 4.000000e+00 : f32
      %41 = vector.broadcast %cst_21 : f32 to vector<8x1xf32>
      %42 = arith.divf %40, %41 : vector<8x1xf32>
      %cst_22 = arith.constant 9.99999974E-6 : f32
      %43 = vector.broadcast %cst_22 : f32 to vector<8x1xf32>
      %44 = arith.addf %42, %43 : vector<8x1xf32>
      %45 = math.rsqrt %44 : vector<8x1xf32>
      %46 = vector.broadcast %45 : vector<8x1xf32> to vector<8x4xf32>
      %47 = arith.mulf %37, %46 : vector<8x4xf32>
      %48 = vector.broadcast %17 : vector<1x4xf32> to vector<8x4xf32>
      %49 = arith.mulf %47, %48 : vector<8x4xf32>
      %50 = vector.broadcast %18 : vector<1x4xf32> to vector<8x4xf32>
      %51 = arith.addf %49, %50 : vector<8x4xf32>
      %52 = arith.truncf %16 : vector<8x64xf32> to vector<8x64xbf16>
      %c0_23 = arith.constant 0 : index
      %c0_24 = arith.constant 0 : index
      %53 = vector.load %arg8[%c0_23, %c0_24] : memref<64x4xbf16, #tpu.memory_space<vmem>>, vector<64x4xbf16>
      %cst_25 = arith.constant dense<0.000000e+00> : vector<8x4xf32>
      %54 = tpu.matmul %52, %53, %cst_25 {dimension_numbers = #tpu.dot_dimension_numbers<[1], [0], [0], [1], [0, 0, 1, 1], [], []>} : vector<8x64xbf16>, vector<64x4xbf16>, vector<8x4xf32> -> vector<8x4xf32>
      %c0_26 = arith.constant 0 : index
      %c0_27 = arith.constant 0 : index
      %55 = vector.load %arg9[%c0_26, %c0_27] : memref<1x4xf32, #tpu.memory_space<vmem>>, vector<1x4xf32>
      %56 = vector.broadcast %55 : vector<1x4xf32> to vector<8x4xf32>
      %57 = arith.addf %54, %56 : vector<8x4xf32>
      %cst_28 = arith.constant dense<0.000000e+00> : vector<8xf32>
      %58 = vector.multi_reduction <add>, %57, %cst_28 [1] : vector<8x4xf32> to vector<8xf32>
      %59 = vector.shape_cast %58 : vector<8xf32> to vector<8x1xf32>
      %cst_29 = arith.constant 4.000000e+00 : f32
      %60 = vector.broadcast %cst_29 : f32 to vector<8x1xf32>
      %61 = arith.divf %59, %60 : vector<8x1xf32>
      %62 = vector.broadcast %61 : vector<8x1xf32> to vector<8x4xf32>
      %63 = arith.subf %57, %62 : vector<8x4xf32>
      %64 = arith.mulf %63, %63 : vector<8x4xf32>
      %cst_30 = arith.constant dense<0.000000e+00> : vector<8xf32>
      %65 = vector.multi_reduction <add>, %64, %cst_30 [1] : vector<8x4xf32> to vector<8xf32>
      %66 = vector.shape_cast %65 : vector<8xf32> to vector<8x1xf32>
      %cst_31 = arith.constant 4.000000e+00 : f32
      %67 = vector.broadcast %cst_31 : f32 to vector<8x1xf32>
      %68 = arith.divf %66, %67 : vector<8x1xf32>
      %cst_32 = arith.constant 9.99999974E-6 : f32
      %69 = vector.broadcast %cst_32 : f32 to vector<8x1xf32>
      %70 = arith.addf %68, %69 : vector<8x1xf32>
      %71 = math.rsqrt %70 : vector<8x1xf32>
      %72 = vector.broadcast %71 : vector<8x1xf32> to vector<8x4xf32>
      %73 = arith.mulf %63, %72 : vector<8x4xf32>
      %74 = vector.broadcast %17 : vector<1x4xf32> to vector<8x4xf32>
      %75 = arith.mulf %73, %74 : vector<8x4xf32>
      %76 = vector.broadcast %18 : vector<1x4xf32> to vector<8x4xf32>
      %77 = arith.addf %75, %76 : vector<8x4xf32>
      %78 = arith.index_cast %20 : i32 to index
      %c0_33 = arith.constant 0 : index
      %79 = vector.load %arg16[%78, %c0_33] : memref<8x4xf32, #tpu.memory_space<vmem>>, vector<8x4xf32>
      tpu.vector_store %arg16[%78, %c0_33], %51 {strides = array<i32>} : memref<8x4xf32, #tpu.memory_space<vmem>>, vector<8x4xf32>,
      %80 = arith.index_cast %20 : i32 to index
      %c0_34 = arith.constant 0 : index
      %81 = vector.load %arg17[%80, %c0_34] : memref<8x4xf32, #tpu.memory_space<vmem>>, vector<8x4xf32>
      tpu.vector_store %arg17[%80, %c0_34], %77 {strides = array<i32>} : memref<8x4xf32, #tpu.memory_space<vmem>>, vector<8x4xf32>,
    } else {
    }
    %c1_i32 = arith.constant 1 : i32
    %24 = arith.cmpi eq, %arg1, %c1_i32 : i32
    %25 = arith.extui %24 : i1 to i32
    %c0_i32_12 = arith.constant 0 : i32
    %26 = arith.cmpi ne, %25, %c0_i32_12 : i32
    scf.if %26 {
      %27 = arith.index_cast %20 : i32 to index
      %c0_13 = arith.constant 0 : index
      %28 = vector.load %arg16[%27, %c0_13] : memref<8x4xf32, #tpu.memory_space<vmem>>, vector<8x4xf32>
      %29 = arith.truncf %28 : vector<8x4xf32> to vector<8x4xbf16>
      %c0_14 = arith.constant 0 : index
      %c0_15 = arith.constant 0 : index
      %30 = vector.load %arg16[%c0_14, %c0_15] : memref<8x4xf32, #tpu.memory_space<vmem>>, vector<8x4xf32>
      %31 = arith.truncf %30 : vector<8x4xf32> to vector<8x4xbf16>
      %c0_16 = arith.constant 0 : index
      %c0_17 = arith.constant 0 : index
      %32 = vector.load %arg17[%c0_16, %c0_17] : memref<8x4xf32, #tpu.memory_space<vmem>>, vector<8x4xf32>
      %33 = arith.truncf %32 : vector<8x4xf32> to vector<8x4xbf16>
      %cst_18 = arith.constant dense<0.000000e+00> : vector<8x8xf32>
      %34 = tpu.matmul %29, %33, %cst_18 {dimension_numbers = #tpu.dot_dimension_numbers<[1], [1], [0], [0], [0, 0, 1, 0], [], []>} : vector<8x4xbf16>, vector<8x4xbf16>, vector<8x8xf32> -> vector<8x8xf32>
      %cst_19 = arith.constant -5.000000e+00 : f32
      %cst_20 = arith.constant 5.000000e+00 : f32
      %35 = vector.broadcast %cst_19 : f32 to vector<8x8xf32>
      %36 = arith.maximumf %35, %34 : vector<8x8xf32>
      %37 = vector.broadcast %cst_20 : f32 to vector<8x8xf32>
      %38 = arith.minimumf %37, %36 : vector<8x8xf32>
      %39 = arith.negf %38 : vector<8x8xf32>
      %40 = math.exp %39 : vector<8x8xf32>
      %cst_21 = arith.constant 1.000000e+00 : f32
      %41 = vector.broadcast %cst_21 : f32 to vector<8x8xf32>
      %42 = arith.addf %41, %40 : vector<8x8xf32>
      %43 = arith.divf %41, %42 : vector<8x8xf32>
      %44 = arith.mulf %38, %43 : vector<8x8xf32>
      %45 = arith.truncf %44 : vector<8x8xf32> to vector<8x8xbf16>
      %cst_22 = arith.constant dense<0.000000e+00> : vector<8x4xf32>
      %46 = tpu.matmul %45, %31, %cst_22 {dimension_numbers = #tpu.dot_dimension_numbers<[1], [0], [0], [1], [0, 0, 1, 1], [], []>} : vector<8x8xbf16>, vector<8x4xbf16>, vector<8x4xf32> -> vector<8x4xf32>
      %47 = arith.truncf %46 : vector<8x4xf32> to vector<8x4xbf16>
      %c0_23 = arith.constant 0 : index
      %c0_24 = arith.constant 0 : index
      %48 = vector.load %arg12[%c0_23, %c0_24] : memref<4x64xbf16, #tpu.memory_space<vmem>>, vector<4x64xbf16>
      %cst_25 = arith.constant dense<0.000000e+00> : vector<8x64xf32>
      %49 = tpu.matmul %47, %48, %cst_25 {dimension_numbers = #tpu.dot_dimension_numbers<[1], [0], [0], [1], [0, 0, 1, 1], [], []>} : vector<8x4xbf16>, vector<4x64xbf16>, vector<8x64xf32> -> vector<8x64xf32>
      %cst_26 = arith.constant 1.000000e-01 : f32
      %50 = vector.broadcast %cst_26 : f32 to vector<8x64xf32>
      %51 = arith.mulf %50, %49 : vector<8x64xf32>
      %52 = arith.addf %16, %51 : vector<8x64xf32>
      %53 = arith.truncf %52 : vector<8x64xf32> to vector<8x64xbf16>
      %c0_27 = arith.constant 0 : index
      %c0_28 = arith.constant 0 : index
      %54 = vector.load %arg13[%c0_27, %c0_28] : memref<64x32xbf16, #tpu.memory_space<vmem>>, vector<64x32xbf16>
      %cst_29 = arith.constant dense<0.000000e+00> : vector<8x32xf32>
      %55 = tpu.matmul %53, %54, %cst_29 {dimension_numbers = #tpu.dot_dimension_numbers<[1], [0], [0], [1], [0, 0, 1, 1], [], []>} : vector<8x64xbf16>, vector<64x32xbf16>, vector<8x32xf32> -> vector<8x32xf32>
      %c0_30 = arith.constant 0 : index
      %c0_31 = arith.constant 0 : index
      %56 = vector.load %arg14[%c0_30, %c0_31] : memref<1x32xf32, #tpu.memory_space<vmem>>, vector<1x32xf32>
      %57 = vector.broadcast %56 : vector<1x32xf32> to vector<8x32xf32>
      %58 = arith.addf %55, %57 : vector<8x32xf32>
      %c0_32 = arith.constant 0 : index
      %c0_33 = arith.constant 0 : index
      %c0_34 = arith.constant 0 : index
      %59 = vector.load %arg15[%c0_32, %c0_33, %c0_34] : memref<1x8x32xf32, #tpu.memory_space<vmem>>, vector<1x8x32xf32>
      %60 = vector.shape_cast %59 : vector<1x8x32xf32> to vector<8x32xf32>
      %61 = vector.shape_cast %58 : vector<8x32xf32> to vector<1x8x32xf32>
      tpu.vector_store %arg15[%c0_32, %c0_33, %c0_34], %61 {strides = array<i32>} : memref<1x8x32xf32, #tpu.memory_space<vmem>>, vector<1x8x32xf32>,
    } else {
    }
    return
  }
  func.func @transform_0(%arg0: i32, %arg1: i32, %arg2: i32) -> (i32, i32, i32) {
    %c0_i32 = arith.constant 0 : i32
    %c0_i32_0 = arith.constant 0 : i32
    return %arg0, %arg2, %c0_i32 : i32, i32, i32
  }
  func.func @transform_1(%arg0: i32, %arg1: i32, %arg2: i32) -> (i32, i32) {
    %c0_i32 = arith.constant 0 : i32
    %c0_i32_0 = arith.constant 0 : i32
    %c0_i32_1 = arith.constant 0 : i32
    return %c0_i32, %c0_i32_0 : i32, i32
  }
  func.func @transform_2(%arg0: i32, %arg1: i32, %arg2: i32) -> (i32, i32) {
    %c0_i32 = arith.constant 0 : i32
    %c0_i32_0 = arith.constant 0 : i32
    %c0_i32_1 = arith.constant 0 : i32
    return %c0_i32, %c0_i32_0 : i32, i32
  }
  func.func @transform_3(%arg0: i32, %arg1: i32, %arg2: i32) -> (i32, i32) {
    %c0_i32 = arith.constant 0 : i32
    %c0_i32_0 = arith.constant 0 : i32
    %c0_i32_1 = arith.constant 0 : i32
    return %c0_i32, %c0_i32_0 : i32, i32
  }
  func.func @transform_4(%arg0: i32, %arg1: i32, %arg2: i32) -> (i32, i32) {
    %c0_i32 = arith.constant 0 : i32
    %c0_i32_0 = arith.constant 0 : i32
    %c0_i32_1 = arith.constant 0 : i32
    return %c0_i32, %c0_i32_0 : i32, i32
  }
  func.func @transform_5(%arg0: i32, %arg1: i32, %arg2: i32) -> (i32, i32) {
    %c0_i32 = arith.constant 0 : i32
    %c0_i32_0 = arith.constant 0 : i32
    %c0_i32_1 = arith.constant 0 : i32
    return %c0_i32, %c0_i32_0 : i32, i32
  }
  func.func @transform_6(%arg0: i32, %arg1: i32, %arg2: i32) -> (i32, i32) {
    %c0_i32 = arith.constant 0 : i32
    %c0_i32_0 = arith.constant 0 : i32
    %c0_i32_1 = arith.constant 0 : i32
    return %c0_i32, %c0_i32_0 : i32, i32
  }
  func.func @transform_7(%arg0: i32, %arg1: i32, %arg2: i32) -> (i32, i32) {
    %c0_i32 = arith.constant 0 : i32
    %c0_i32_0 = arith.constant 0 : i32
    %c0_i32_1 = arith.constant 0 : i32
    return %c0_i32, %c0_i32_0 : i32, i32
  }
  func.func @transform_8(%arg0: i32, %arg1: i32, %arg2: i32) -> (i32, i32) {
    %c0_i32 = arith.constant 0 : i32
    %c0_i32_0 = arith.constant 0 : i32
    %c0_i32_1 = arith.constant 0 : i32
    return %c0_i32, %c0_i32_0 : i32, i32
  }
  func.func @transform_9(%arg0: i32, %arg1: i32, %arg2: i32) -> (i32, i32) {
    %c0_i32 = arith.constant 0 : i32
    %c0_i32_0 = arith.constant 0 : i32
    %c0_i32_1 = arith.constant 0 : i32
    return %c0_i32, %c0_i32_0 : i32, i32
  }
  func.func @transform_10(%arg0: i32, %arg1: i32, %arg2: i32) -> (i32, i32) {
    %c0_i32 = arith.constant 0 : i32
    %c0_i32_0 = arith.constant 0 : i32
    %c0_i32_1 = arith.constant 0 : i32
    return %c0_i32, %c0_i32_0 : i32, i32
  }
  func.func @transform_11(%arg0: i32, %arg1: i32, %arg2: i32) -> (i32, i32) {
    %c0_i32 = arith.constant 0 : i32
    %c0_i32_0 = arith.constant 0 : i32
    %c0_i32_1 = arith.constant 0 : i32
    return %c0_i32, %c0_i32_0 : i32, i32
  }
  func.func @transform_12(%arg0: i32, %arg1: i32, %arg2: i32) -> (i32, i32, i32) {
    %0 = arith.muli %arg2, %arg1 : i32
    %c0_i32 = arith.constant 0 : i32
    %c0_i32_0 = arith.constant 0 : i32
    return %arg0, %0, %c0_i32 : i32, i32, i32
  }
}

</mosaic_0001>

<llo_original>
// kernel: tpu_custom_call.1
$region0: #{tpu_custom_call.1}
  #allocation0 [shape = 'u32[]', space=smem, size = 0x4, offset = 0x4, fixed_abs, tag = 'smem constant byte address 0x4 - core index']
  #allocation1 [shape = 'u32[144,128]{1,0:T(1,128)}', space=vmem, size = 0x12000, scoped, tag = 'internal scratch']
  #allocation2 [shape = 'f32[8,4]{1,0:T(8,128)}', space=vmem, size = 0x1000, scoped, tag = 'scratch operand']
  #allocation3 [shape = 'f32[8,4]{1,0:T(8,128)}', space=vmem, size = 0x1000, scoped, tag = 'scratch operand']
  %s0 = inlined_call_operand.vmem [shape: f32[2,8,32], index: 0, kind: input, shape index: {}]
  %s1 = inlined_call_operand.vmem [shape: bf16[32,128], index: 1, kind: input, shape index: {}]
  %s2 = inlined_call_operand.vmem [shape: f32[1,128], index: 2, kind: input, shape index: {}]
  %s3 = inlined_call_operand.vmem [shape: bf16[32,4], index: 3, kind: input, shape index: {}]
  %s4 = inlined_call_operand.vmem [shape: f32[1,4], index: 4, kind: input, shape index: {}]
  %s5 = inlined_call_operand.vmem [shape: bf16[64,4], index: 5, kind: input, shape index: {}]
  %s6 = inlined_call_operand.vmem [shape: f32[1,4], index: 6, kind: input, shape index: {}]
  %s7 = inlined_call_operand.vmem [shape: f32[1,4], index: 7, kind: input, shape index: {}]
  %s8 = inlined_call_operand.vmem [shape: f32[1,4], index: 8, kind: input, shape index: {}]
  %s9 = inlined_call_operand.vmem [shape: bf16[4,64], index: 9, kind: input, shape index: {}]
  %s10 = inlined_call_operand.vmem [shape: bf16[64,32], index: 10, kind: input, shape index: {}]
  %s11 = inlined_call_operand.vmem [shape: f32[1,32], index: 11, kind: input, shape index: {}]
  %s12 = inlined_call_operand.hbm [shape: f32[2,8,32], index: 12, kind: output, shape index: {}]
  %s13 = sld [smem:[#allocation0]]
  $region89: #{tpu_custom_call.1} parent=0
    _
  %s15 = ssub.s32 1, %s13
  %s16 = scalar_select 0, %s15, %s13
  $region1: #{tpu_custom_call.1} parent=0
    #allocation4 [shape = 'u8[8192]{0}', space=vmem, size = 0x2000, scoped, tag = 'output window, operand 0']
    #allocation5 [shape = 's32[2]{0}', space=sflag, size = 0x8, scoped, tag = 'scoped memory for tpu_custom_call.1']
    %17 = vsyncpa [#allocation5], 0
    %s18 = scalar_lea.sflag [#allocation5], 1
    %19 = vsyncpa %s18, 0
    loop: start=0, step=1, limit=6
    $region2: #{tpu_custom_call.1} parent=1 // loop_pre_header
      _
    $region3: #{tpu_custom_call.1} parent=1 // loop_header
      %s21 = sphi 0, %s25
      %p22 = scmp.ge.s32.totalorder %s21, 6
      %s28 = sphi 0, %s47
      %s29 = sphi 0, %s43
      %s30 = sphi 0, %s39
      %s31 = sphi 0, %s28
      %s32 = sphi 0, %s29
      %s33 = sphi 0, %s30
      %s34 = sphi 0, %s31
      %s35 = sphi 0, %s32
      %s36 = sphi 0, %s33
      %s52 = sphi 0, %s54
      %s55 = sphi 0, %s52
      %s56 = sphi 0, %s55
      %s72 = sphi 0, %s56
      %s76 = sphi 0, %s76
      %s78 = sphi 0, %s76
      %s79 = sphi 0, %s78
      %s93 = sphi 0, %s79
      %s97 = sphi 0, %s97
      %s99 = sphi 0, %s97
      %s100 = sphi 0, %s99
      %s114 = sphi 0, %s100
      %s118 = sphi 0, %s118
      %s120 = sphi 0, %s118
      %s121 = sphi 0, %s120
      %s135 = sphi 0, %s121
      %s139 = sphi 0, %s139
      %s141 = sphi 0, %s139
      %s142 = sphi 0, %s141
      %s156 = sphi 0, %s142
      %s160 = sphi 0, %s160
      %s162 = sphi 0, %s160
      %s163 = sphi 0, %s162
      %s177 = sphi 0, %s163
      %s181 = sphi 0, %s181
      %s183 = sphi 0, %s181
      %s184 = sphi 0, %s183
      %s198 = sphi 0, %s184
      %s202 = sphi 0, %s202
      %s204 = sphi 0, %s202
      %s205 = sphi 0, %s204
      %s219 = sphi 0, %s205
      %s223 = sphi 0, %s223
      %s225 = sphi 0, %s223
      %s226 = sphi 0, %s225
      %s240 = sphi 0, %s226
      %s244 = sphi 0, %s244
      %s246 = sphi 0, %s244
      %s247 = sphi 0, %s246
      %s261 = sphi 0, %s247
      %s265 = sphi 0, %s265
      %s267 = sphi 0, %s265
      %s268 = sphi 0, %s267
      %s282 = sphi 0, %s268
      %s286 = sphi 0, %s286
      %s288 = sphi 0, %s286
      %s289 = sphi 0, %s288
      %s303 = sphi 0, %s289
      %s313 = sphi 0, %s315
      %s316 = sphi 0, %s313
      %s317 = sphi 0, %s316
      %s333 = sphi 0, %s317
    $region4: #{tpu_custom_call.1} parent=1 // loop_header_branch
      %24 = sbr.rel (%p22) target = $region8
    $region5: #{tpu_custom_call.1} parent=1 // loop_body
      %s26 = ssub.s32 %s21, 1
      %s27 = ssub.s32 %s21, 2
      %s37 = sadd.s32 1, %s30
      %p38 = scmp.ge.s32.totalorder %s37, 1
      %s39 = scalar_select %p38, 0, %s37
      %s40 = sadd.s32 1, %s29
      %s41 = scalar_select %p38, %s40, %s29
      %p42 = scmp.ge.s32.totalorder %s41, 2
      %s43 = scalar_select %p42, 0, %s41
      %s44 = sadd.s32 1, %s28
      %s45 = scalar_select %p42, %s44, %s28
      %p46 = scmp.ge.s32.totalorder %s45, 2
      %s47 = scalar_select %p46, 0, %s45
      %s48 = ssub.s32 %s28, %s47
      %s49 = ssub.s32 %s30, %s39
      %s50 = sor.u32 %s48, %s49
      %p51 = scmp.eq.s32.totalorder %s50, 0
      %s53 = sadd.s32 %s52, 1
      %s54 = scalar_select %p51, %s52, %s53
      %p57 = pneg %p51
      %p58 = scmp.eq.s32.totalorder %s21, 3
      %p59 = por %p57, %p58
      %p60 = scmp.ne.s32.totalorder %s52, %s55
      %p61 = scmp.eq.s32.totalorder %s21, 0
      %p62 = por %p60, %p61
      %p63 = scmp.ne.s32.totalorder %s52, %s55
      %p64 = scmp.eq.s32.totalorder %s26, 3
      %p65 = por %p63, %p64
      %p66 = scmp.ne.s32.totalorder %s55, %s56
      %p67 = scmp.eq.s32.totalorder %s26, 0
      %p68 = por %p66, %p67
      %p69 = scmp.ne.s32.totalorder %s55, %s56
      %p70 = scmp.eq.s32.totalorder %s27, 3
      %p71 = por %p69, %p70
      %p73 = scmp.ne.s32.totalorder %s56, %s72
      %p74 = scmp.eq.s32.totalorder %s27, 0
      %p75 = por %p73, %p74
      %s77 = sadd.s32 %s76, 1
      %p80 = scmp.eq.s32.totalorder %s21, 3
      %p81 = scmp.ne.s32.totalorder %s76, %s78
      %p82 = scmp.eq.s32.totalorder %s21, 0
      %p83 = por %p81, %p82
      %p84 = scmp.ne.s32.totalorder %s76, %s78
      %p85 = scmp.eq.s32.totalorder %s26, 3
      %p86 = por %p84, %p85
      %p87 = scmp.ne.s32.totalorder %s78, %s79
      %p88 = scmp.eq.s32.totalorder %s26, 0
      %p89 = por %p87, %p88
      %p90 = scmp.ne.s32.totalorder %s78, %s79
      %p91 = scmp.eq.s32.totalorder %s27, 3
      %p92 = por %p90, %p91
      %p94 = scmp.ne.s32.totalorder %s79, %s93
      %p95 = scmp.eq.s32.totalorder %s27, 0
      %p96 = por %p94, %p95
      %s98 = sadd.s32 %s97, 1
      %p101 = scmp.eq.s32.totalorder %s21, 3
      %p102 = scmp.ne.s32.totalorder %s97, %s99
      %p103 = scmp.eq.s32.totalorder %s21, 0
      %p104 = por %p102, %p103
      %p105 = scmp.ne.s32.totalorder %s97, %s99
      %p106 = scmp.eq.s32.totalorder %s26, 3
      %p107 = por %p105, %p106
      %p108 = scmp.ne.s32.totalorder %s99, %s100
      %p109 = scmp.eq.s32.totalorder %s26, 0
      %p110 = por %p108, %p109
      %p111 = scmp.ne.s32.totalorder %s99, %s100
      %p112 = scmp.eq.s32.totalorder %s27, 3
      %p113 = por %p111, %p112
      %p115 = scmp.ne.s32.totalorder %s100, %s114
      %p116 = scmp.eq.s32.totalorder %s27, 0
      %p117 = por %p115, %p116
      %s119 = sadd.s32 %s118, 1
      %p122 = scmp.eq.s32.totalorder %s21, 3
      %p123 = scmp.ne.s32.totalorder %s118, %s120
      %p124 = scmp.eq.s32.totalorder %s21, 0
      %p125 = por %p123, %p124
      %p126 = scmp.ne.s32.totalorder %s118, %s120
      %p127 = scmp.eq.s32.totalorder %s26, 3
      %p128 = por %p126, %p127
      %p129 = scmp.ne.s32.totalorder %s120, %s121
      %p130 = scmp.eq.s32.totalorder %s26, 0
      %p131 = por %p129, %p130
      %p132 = scmp.ne.s32.totalorder %s120, %s121
      %p133 = scmp.eq.s32.totalorder %s27, 3
      %p134 = por %p132, %p133
      %p136 = scmp.ne.s32.totalorder %s121, %s135
      %p137 = scmp.eq.s32.totalorder %s27, 0
      %p138 = por %p136, %p137
      %s140 = sadd.s32 %s139, 1
      %p143 = scmp.eq.s32.totalorder %s21, 3
      %p144 = scmp.ne.s32.totalorder %s139, %s141
      %p145 = scmp.eq.s32.totalorder %s21, 0
      %p146 = por %p144, %p145
      %p147 = scmp.ne.s32.totalorder %s139, %s141
      %p148 = scmp.eq.s32.totalorder %s26, 3
      %p149 = por %p147, %p148
      %p150 = scmp.ne.s32.totalorder %s141, %s142
      %p151 = scmp.eq.s32.totalorder %s26, 0
      %p152 = por %p150, %p151
      %p153 = scmp.ne.s32.totalorder %s141, %s142
      %p154 = scmp.eq.s32.totalorder %s27, 3
      %p155 = por %p153, %p154
      %p157 = scmp.ne.s32.totalorder %s142, %s156
      %p158 = scmp.eq.s32.totalorder %s27, 0
      %p159 = por %p157, %p158
      %s161 = sadd.s32 %s160, 1
      %p164 = scmp.eq.s32.totalorder %s21, 3
      %p165 = scmp.ne.s32.totalorder %s160, %s162
      %p166 = scmp.eq.s32.totalorder %s21, 0
      %p167 = por %p165, %p166
      %p168 = scmp.ne.s32.totalorder %s160, %s162
      %p169 = scmp.eq.s32.totalorder %s26, 3
      %p170 = por %p168, %p169
      %p171 = scmp.ne.s32.totalorder %s162, %s163
      %p172 = scmp.eq.s32.totalorder %s26, 0
      %p173 = por %p171, %p172
      %p174 = scmp.ne.s32.totalorder %s162, %s163
      %p175 = scmp.eq.s32.totalorder %s27, 3
      %p176 = por %p174, %p175
      %p178 = scmp.ne.s32.totalorder %s163, %s177
      %p179 = scmp.eq.s32.totalorder %s27, 0
      %p180 = por %p178, %p179
      %s182 = sadd.s32 %s181, 1
      %p185 = scmp.eq.s32.totalorder %s21, 3
      %p186 = scmp.ne.s32.totalorder %s181, %s183
      %p187 = scmp.eq.s32.totalorder %s21, 0
      %p188 = por %p186, %p187
      %p189 = scmp.ne.s32.totalorder %s181, %s183
      %p190 = scmp.eq.s32.totalorder %s26, 3
      %p191 = por %p189, %p190
      %p192 = scmp.ne.s32.totalorder %s183, %s184
      %p193 = scmp.eq.s32.totalorder %s26, 0
      %p194 = por %p192, %p193
      %p195 = scmp.ne.s32.totalorder %s183, %s184
      %p196 = scmp.eq.s32.totalorder %s27, 3
      %p197 = por %p195, %p196
      %p199 = scmp.ne.s32.totalorder %s184, %s198
      %p200 = scmp.eq.s32.totalorder %s27, 0
      %p201 = por %p199, %p200
      %s203 = sadd.s32 %s202, 1
      %p206 = scmp.eq.s32.totalorder %s21, 3
      %p207 = scmp.ne.s32.totalorder %s202, %s204
      %p208 = scmp.eq.s32.totalorder %s21, 0
      %p209 = por %p207, %p208
      %p210 = scmp.ne.s32.totalorder %s202, %s204
      %p211 = scmp.eq.s32.totalorder %s26, 3
      %p212 = por %p210, %p211
      %p213 = scmp.ne.s32.totalorder %s204, %s205
      %p214 = scmp.eq.s32.totalorder %s26, 0
      %p215 = por %p213, %p214
      %p216 = scmp.ne.s32.totalorder %s204, %s205
      %p217 = scmp.eq.s32.totalorder %s27, 3
      %p218 = por %p216, %p217
      %p220 = scmp.ne.s32.totalorder %s205, %s219
      %p221 = scmp.eq.s32.totalorder %s27, 0
      %p222 = por %p220, %p221
      %s224 = sadd.s32 %s223, 1
      %p227 = scmp.eq.s32.totalorder %s21, 3
      %p228 = scmp.ne.s32.totalorder %s223, %s225
      %p229 = scmp.eq.s32.totalorder %s21, 0
      %p230 = por %p228, %p229
      %p231 = scmp.ne.s32.totalorder %s223, %s225
      %p232 = scmp.eq.s32.totalorder %s26, 3
      %p233 = por %p231, %p232
      %p234 = scmp.ne.s32.totalorder %s225, %s226
      %p235 = scmp.eq.s32.totalorder %s26, 0
      %p236 = por %p234, %p235
      %p237 = scmp.ne.s32.totalorder %s225, %s226
      %p238 = scmp.eq.s32.totalorder %s27, 3
      %p239 = por %p237, %p238
      %p241 = scmp.ne.s32.totalorder %s226, %s240
      %p242 = scmp.eq.s32.totalorder %s27, 0
      %p243 = por %p241, %p242
      %s245 = sadd.s32 %s244, 1
      %p248 = scmp.eq.s32.totalorder %s21, 3
      %p249 = scmp.ne.s32.totalorder %s244, %s246
      %p250 = scmp.eq.s32.totalorder %s21, 0
      %p251 = por %p249, %p250
      %p252 = scmp.ne.s32.totalorder %s244, %s246
      %p253 = scmp.eq.s32.totalorder %s26, 3
      %p254 = por %p252, %p253
      %p255 = scmp.ne.s32.totalorder %s246, %s247
      %p256 = scmp.eq.s32.totalorder %s26, 0
      %p257 = por %p255, %p256
      %p258 = scmp.ne.s32.totalorder %s246, %s247
      %p259 = scmp.eq.s32.totalorder %s27, 3
      %p260 = por %p258, %p259
      %p262 = scmp.ne.s32.totalorder %s247, %s261
      %p263 = scmp.eq.s32.totalorder %s27, 0
      %p264 = por %p262, %p263
      %s266 = sadd.s32 %s265, 1
      %p269 = scmp.eq.s32.totalorder %s21, 3
      %p270 = scmp.ne.s32.totalorder %s265, %s267
      %p271 = scmp.eq.s32.totalorder %s21, 0
      %p272 = por %p270, %p271
      %p273 = scmp.ne.s32.totalorder %s265, %s267
      %p274 = scmp.eq.s32.totalorder %s26, 3
      %p275 = por %p273, %p274
      %p276 = scmp.ne.s32.totalorder %s267, %s268
      %p277 = scmp.eq.s32.totalorder %s26, 0
      %p278 = por %p276, %p277
      %p279 = scmp.ne.s32.totalorder %s267, %s268
      %p280 = scmp.eq.s32.totalorder %s27, 3
      %p281 = por %p279, %p280
      %p283 = scmp.ne.s32.totalorder %s268, %s282
      %p284 = scmp.eq.s32.totalorder %s27, 0
      %p285 = por %p283, %p284
      %s287 = sadd.s32 %s286, 1
      %p290 = scmp.eq.s32.totalorder %s21, 3
      %p291 = scmp.ne.s32.totalorder %s286, %s288
      %p292 = scmp.eq.s32.totalorder %s21, 0
      %p293 = por %p291, %p292
      %p294 = scmp.ne.s32.totalorder %s286, %s288
      %p295 = scmp.eq.s32.totalorder %s26, 3
      %p296 = por %p294, %p295
      %p297 = scmp.ne.s32.totalorder %s288, %s289
      %p298 = scmp.eq.s32.totalorder %s26, 0
      %p299 = por %p297, %p298
      %p300 = scmp.ne.s32.totalorder %s288, %s289
      %p301 = scmp.eq.s32.totalorder %s27, 3
      %p302 = por %p300, %p301
      %p304 = scmp.ne.s32.totalorder %s289, %s303
      %p305 = scmp.eq.s32.totalorder %s27, 0
      %p306 = por %p304, %p305
      %s307 = smul.u32 %s30, %s29
      %s308 = smul.u32 %s39, %s43
      %s309 = ssub.s32 %s28, %s47
      %s310 = ssub.s32 %s307, %s308
      %s311 = sor.u32 %s309, %s310
      %p312 = scmp.eq.s32.totalorder %s311, 0
      %s314 = sadd.s32 %s313, 1
      %s315 = scalar_select %p312, %s313, %s314
      %p318 = pneg %p312
      %p319 = scmp.eq.s32.totalorder %s21, 3
      %p320 = por %p318, %p319
      %p321 = scmp.ne.s32.totalorder %s313, %s316
      %p322 = scmp.eq.s32.totalorder %s21, 0
      %p323 = por %p321, %p322
      %p324 = scmp.ne.s32.totalorder %s313, %s316
      %p325 = scmp.eq.s32.totalorder %s26, 3
      %p326 = por %p324, %p325
      %p327 = scmp.ne.s32.totalorder %s316, %s317
      %p328 = scmp.eq.s32.totalorder %s26, 0
      %p329 = por %p327, %p328
      %p330 = scmp.ne.s32.totalorder %s316, %s317
      %p331 = scmp.eq.s32.totalorder %s27, 3
      %p332 = por %p330, %p331
      %p334 = scmp.ne.s32.totalorder %s317, %s333
      %p335 = scmp.eq.s32.totalorder %s27, 0
      %p336 = por %p334, %p335
      %p337 = scmp.le.s32.totalorder 1, %s21
      %p338 = scmp.lt.s32.totalorder %s21, 5
      %p339 = pnand %p337, %p338
      %p340 = pneg %p339
      // Predicated region
      $region9: #{tpu_custom_call.1} parent=5 // pred_check
        _
      $region10: #{tpu_custom_call.1} parent=5 // pred_check_branch
        %342 = sbr.rel (%p339) target = $region12
      $region11: #{tpu_custom_call.1} parent=5 // pred_region
        %s343 = ssub.s32 %s21, 1
        // Predicated region
        $region13: #{tpu_custom_call.1} parent=11 // pred_check
          %p344 = pneg %p89
        $region14: #{tpu_custom_call.1} parent=11 // pred_check_branch
          %346 = sbr.rel (%p344) target = $region16
        $region15: #{tpu_custom_call.1} parent=11 // pred_region
          _
        $region16: #{tpu_custom_call.1} parent=11 // pred_fallthru
          _
        // Predicated region
        $region17: #{tpu_custom_call.1} parent=11 // pred_check
          %p347 = pneg %p110
        $region18: #{tpu_custom_call.1} parent=11 // pred_check_branch
          %349 = sbr.rel (%p347) target = $region20
        $region19: #{tpu_custom_call.1} parent=11 // pred_region
          _
        $region20: #{tpu_custom_call.1} parent=11 // pred_fallthru
          _
        // Predicated region
        $region21: #{tpu_custom_call.1} parent=11 // pred_check
          %p350 = pneg %p131
        $region22: #{tpu_custom_call.1} parent=11 // pred_check_branch
          %352 = sbr.rel (%p350) target = $region24
        $region23: #{tpu_custom_call.1} parent=11 // pred_region
          _
        $region24: #{tpu_custom_call.1} parent=11 // pred_fallthru
          _
        // Predicated region
        $region25: #{tpu_custom_call.1} parent=11 // pred_check
          %p353 = pneg %p152
        $region26: #{tpu_custom_call.1} parent=11 // pred_check_branch
          %355 = sbr.rel (%p353) target = $region28
        $region27: #{tpu_custom_call.1} parent=11 // pred_region
          _
        $region28: #{tpu_custom_call.1} parent=11 // pred_fallthru
          _
        // Predicated region
        $region29: #{tpu_custom_call.1} parent=11 // pred_check
          %p356 = pneg %p173
        $region30: #{tpu_custom_call.1} parent=11 // pred_check_branch
          %358 = sbr.rel (%p356) target = $region32
        $region31: #{tpu_custom_call.1} parent=11 // pred_region
          _
        $region32: #{tpu_custom_call.1} parent=11 // pred_fallthru
          _
        // Predicated region
        $region33: #{tpu_custom_call.1} parent=11 // pred_check
          %p359 = pneg %p194
        $region34: #{tpu_custom_call.1} parent=11 // pred_check_branch
          %361 = sbr.rel (%p359) target = $region36
        $region35: #{tpu_custom_call.1} parent=11 // pred_region
          _
        $region36: #{tpu_custom_call.1} parent=11 // pred_fallthru
          _
        // Predicated region
        $region37: #{tpu_custom_call.1} parent=11 // pred_check
          %p362 = pneg %p215
        $region38: #{tpu_custom_call.1} parent=11 // pred_check_branch
          %364 = sbr.rel (%p362) target = $region40
        $region39: #{tpu_custom_call.1} parent=11 // pred_region
          _
        $region40: #{tpu_custom_call.1} parent=11 // pred_fallthru
          _
        // Predicated region
        $region41: #{tpu_custom_call.1} parent=11 // pred_check
          %p365 = pneg %p236
        $region42: #{tpu_custom_call.1} parent=11 // pred_check_branch
          %367 = sbr.rel (%p365) target = $region44
        $region43: #{tpu_custom_call.1} parent=11 // pred_region
          _
        $region44: #{tpu_custom_call.1} parent=11 // pred_fallthru
          _
        // Predicated region
        $region45: #{tpu_custom_call.1} parent=11 // pred_check
          %p368 = pneg %p257
        $region46: #{tpu_custom_call.1} parent=11 // pred_check_branch
          %370 = sbr.rel (%p368) target = $region48
        $region47: #{tpu_custom_call.1} parent=11 // pred_region
          _
        $region48: #{tpu_custom_call.1} parent=11 // pred_fallthru
          _
        // Predicated region
        $region49: #{tpu_custom_call.1} parent=11 // pred_check
          %p371 = pneg %p278
        $region50: #{tpu_custom_call.1} parent=11 // pred_check_branch
          %373 = sbr.rel (%p371) target = $region52
        $region51: #{tpu_custom_call.1} parent=11 // pred_region
          _
        $region52: #{tpu_custom_call.1} parent=11 // pred_fallthru
          _
        // Predicated region
        $region53: #{tpu_custom_call.1} parent=11 // pred_check
          %p374 = pneg %p299
        $region54: #{tpu_custom_call.1} parent=11 // pred_check_branch
          %376 = sbr.rel (%p374) target = $region56
        $region55: #{tpu_custom_call.1} parent=11 // pred_region
          _
        $region56: #{tpu_custom_call.1} parent=11 // pred_fallthru
          _
      $region12: #{tpu_custom_call.1} parent=5 // pred_fallthru
        _
      %p377 = scmp.lt.s32.totalorder %s21, 4
      // Predicated region
      $region57: #{tpu_custom_call.1} parent=5 // pred_check
        %p378 = pneg %p377
      $region58: #{tpu_custom_call.1} parent=5 // pred_check_branch
        %380 = sbr.rel (%p378) target = $region60
      $region59: #{tpu_custom_call.1} parent=5 // pred_region
        // Predicated region
        $region61: #{tpu_custom_call.1} parent=59 // pred_check
          %p381 = pneg %p62
        $region62: #{tpu_custom_call.1} parent=59 // pred_check_branch
          %383 = sbr.rel (%p381) target = $region64
        $region63: #{tpu_custom_call.1} parent=59 // pred_region
          %p384 = scmp.lt.s32.totalorder %s28, 1
          %s385 = scalar_select %p384, %s28, 1
          %p386 = scmp.lt.s32.totalorder %s30, 0
          %s387 = scalar_select %p386, %s30, 0
          %s388 = sadd.s32 %s387, %s385
          %s389 = smul.addr %s388, 8
          %s390 = scalar_lea.vmem %s0, %s389
        $region64: #{tpu_custom_call.1} parent=59 // pred_fallthru
          _
      $region60: #{tpu_custom_call.1} parent=5 // pred_fallthru
        _
      %p391 = scmp.le.s32.totalorder 1, %s21
      %p392 = scmp.lt.s32.totalorder %s21, 5
      %p393 = pnand %p391, %p392
      %p394 = pneg %p393
      // Predicated region
      $region65: #{tpu_custom_call.1} parent=5 // pred_check
        _
      $region66: #{tpu_custom_call.1} parent=5 // pred_check_branch
        %396 = sbr.rel (%p393) target = $region68
      $region67: #{tpu_custom_call.1} parent=5 // pred_region
        %s397 = ssub.s32 %s21, 1
        %p398 = scmp.lt.s32.totalorder %s31, 1
        %s399 = scalar_select %p398, %s31, 1
        %p400 = scmp.lt.s32.totalorder %s33, 0
        %s401 = scalar_select %p400, %s33, 0
        %s402 = sadd.s32 %s401, %s399
        %s403 = smul.addr %s402, 8
        %s404 = scalar_lea.vmem %s0, %s403
        %p405 = pneg %p68
        %p406 = pneg %p65
        %p407 = pneg %p89
        %p408 = pneg %p86
        %p409 = pneg %p110
        %p410 = pneg %p107
        %p411 = pneg %p131
        %p412 = pneg %p128
        %p413 = pneg %p152
        %p414 = pneg %p149
        %p415 = pneg %p173
        %p416 = pneg %p170
        %p417 = pneg %p194
        %p418 = pneg %p191
        %p419 = pneg %p215
        %p420 = pneg %p212
        %p421 = pneg %p236
        %p422 = pneg %p233
        %p423 = pneg %p257
        %p424 = pneg %p254
        %p425 = pneg %p278
        %p426 = pneg %p275
        %p427 = pneg %p299
        %p428 = pneg %p296
        %p429 = pneg %p329
        %p430 = pneg %p326
        %s431 = sand.u32 %s316, 1
        %s432 = scalar_lea.sflag [#allocation5], %s431
        %s433 = sand.u32 %s316, 1
        %s434 = smul.addr %s433, 8
        %s435 = scalar_lea.vmem [#allocation4], %s434
        %p436 = scmp.lt.s32.totalorder %s31, 1
        %s437 = scalar_select %p436, %s31, 1
        %p438 = scmp.lt.s32.totalorder %s33, 0
        %s439 = scalar_select %p438, %s33, 0
        %s440 = sadd.s32 %s439, %s437
        %s441 = smul.addr %s440, 8
        %s442 = scalar_lea.vmem %s0, %s441
        %s443 = smul.u32 %s33, %s32
        %v445 = vld [vmem:[%s442] sm:$0xff]
        %v446 = vpack.c.bf16 %v445, %v445
        %v447 = vld [vmem:[%s1] sm:$0xf]
        %v448 = vld [vmem:[%s1 + $0x4] sm:$0xf]
        %v449 = vld [vmem:[%s1 + $0x8] sm:$0xf]
        %v450 = vld [vmem:[%s1 + $0xc] sm:$0xf]
        %v451 = vld [vmem:[%s2] sm:$0x1]
        %v453 = vlaneseq
        %v454 = vshrl.u32 %v453, 7
        %v455 = vsub.s32 0, %v454
        %v456 = vrot.slane %v451, %v455
        %v462 = vunpack.c.l.b16 %v447
        %v463 = vunpack.c.l.b16 %v448
        %v464 = vunpack.c.l.b16 %v449
        %v465 = vunpack.c.l.b16 %v450
        %v466 = vpack.c.b16 %v463, %v462
        %v467 = vpack.c.b16 %v465, %v464
        %vm470 = vcmask 261120
        %v472 = vsel %vm470, %v446, 0
        %474 = vmatprep.subr.bf16.mxu0 0
        %475 = vmatpush1.bf16.msra.mxu0 0
        %476 = vmatprep.subr.bf16.mxu0 0
        %477 = vmatpush1.bf16.msra.mxu0 0
        %478 = vmatprep.subr.bf16.mxu0 0
        %479 = vmatpush1.bf16.msra.mxu0 0
        %480 = vmatprep.subr.bf16.mxu0 0
        %481 = vmatpush1.bf16.msra.mxu0 0
        %482 = vmatprep.subr.bf16.mxu0 0
        %483 = vmatpush1.bf16.msra.mxu0 0
        %484 = vmatprep.subr.bf16.mxu0 0
        %485 = vmatpush1.bf16.msra.mxu0 0
        %486 = vmatprep.subr.bf16.mxu0 0
        %487 = vmatpush1.bf16.msra.mxu0 %v467
        %488 = vmatprep.subr.bf16.mxu0 0
        %489 = vmatpush1.bf16.msra.mxu0 %v466
        %490 = vmatprep.subr.bf16.mxu0 0
        %491 = vmatpush2.bf16.msra.mxu0 0
        %492 = vmatprep.subr.bf16.mxu0 0
        %493 = vmatpush2.bf16.msra.mxu0 0
        %494 = vmatprep.subr.bf16.mxu0 0
        %495 = vmatpush2.bf16.msra.mxu0 0
        %496 = vmatprep.subr.bf16.mxu0 0
        %497 = vmatpush2.bf16.msra.mxu0 0
        %498 = vmatprep.subr.bf16.mxu0 0
        %499 = vmatpush2.bf16.msra.mxu0 0
        %500 = vmatprep.subr.bf16.mxu0 0
        %501 = vmatpush2.bf16.msra.mxu0 0
        %502 = vmatprep.subr.bf16.mxu0 0
        %503 = vmatpush2.bf16.msra.mxu0 0
        %504 = vmatprep.subr.bf16.mxu0 0
        %505 = vmatpush2.bf16.msra.mxu0 0
        %506 = vmatprep.mubr.bf16.mxu0 0
        %507 = vmatmul.mubr.bf16.gmra.mxu0 %v472
        %v508 = vpop.f32.mrf.mxu0
        %v509 = vadd.f32 %v456, %v508
        %v510 = vpop.f32.mrf.mxu0
        %v511 = vpop.f32.mrf.mxu0
        %v512 = vpop.f32.mrf.mxu0
        %513 = vdwg.mxu0
        %v514 = vxor.u32 %v509, 2147483648
        %v515 = vmul.f32 %v514, 1.442695
        %v516 = vpow.pop %v515
        %v517 = vadd.f32 %v516, 1.0
        %v518 = vrcp.pop %v517
        %v519 = vmul.f32 1.0, %v518
        %v520 = vmul.f32 %v509, %v519
        %522 = vrot.lane.b32.xlu0 %v509, 64
        %v523 = vpop.permute.xlu0 %522
        %v525 = vmul.f32 %v520, %v523
        %v526 = vld [vmem:[%s7] sm:$0x1]
        %v527 = vld [vmem:[%s8] sm:$0x1]
        %s528 = smul.u32 %s33, 8
        %p529 = scmp.eq.s32.totalorder %s32, 0
        // Predicated region
        $region69: #{tpu_custom_call.1} parent=67 // pred_check
          %p530 = pneg %p529
        $region70: #{tpu_custom_call.1} parent=67 // pred_check_branch
          %532 = sbr.rel (%p530) target = $region72
        $region71: #{tpu_custom_call.1} parent=67 // pred_region
          %v533 = vld [vmem:[%s3] sm:$0xf]
          %v534 = vld [vmem:[%s3 + $0x4] sm:$0xf]
          %v535 = vld [vmem:[%s3 + $0x8] sm:$0xf]
          %v536 = vld [vmem:[%s3 + $0xc] sm:$0xf]
          %v537 = vld [vmem:[%s4] sm:$0x1]
          %v539 = vlaneseq
          %v540 = vshrl.u32 %v539, 7
          %v541 = vsub.s32 0, %v540
          %v542 = vrot.slane %v537, %v541
          %v548 = vunpack.c.l.b16 %v533
          %v549 = vunpack.c.l.b16 %v534
          %v550 = vunpack.c.l.b16 %v535
          %v551 = vunpack.c.l.b16 %v536
          %v552 = vpack.c.b16 %v549, %v548
          %v553 = vpack.c.b16 %v551, %v550
          %556 = vmatprep.subr.bf16.mxu0 0
          %557 = vmatpush1.bf16.msra.mxu0 0
          %558 = vmatprep.subr.bf16.mxu0 0
          %559 = vmatpush1.bf16.msra.mxu0 0
          %560 = vmatprep.subr.bf16.mxu0 0
          %561 = vmatpush1.bf16.msra.mxu0 0
          %562 = vmatprep.subr.bf16.mxu0 0
          %563 = vmatpush1.bf16.msra.mxu0 0
          %564 = vmatprep.subr.bf16.mxu0 0
          %565 = vmatpush1.bf16.msra.mxu0 0
          %566 = vmatprep.subr.bf16.mxu0 0
          %567 = vmatpush1.bf16.msra.mxu0 0
          %568 = vmatprep.subr.bf16.mxu0 0
          %569 = vmatpush1.bf16.msra.mxu0 %v553
          %570 = vmatprep.subr.bf16.mxu0 0
          %571 = vmatpush1.bf16.msra.mxu0 %v552
          %572 = vmatprep.subr.bf16.mxu0 0
          %573 = vmatpush2.bf16.msra.mxu0 0
          %574 = vmatprep.subr.bf16.mxu0 0
          %575 = vmatpush2.bf16.msra.mxu0 0
          %576 = vmatprep.subr.bf16.mxu0 0
          %577 = vmatpush2.bf16.msra.mxu0 0
          %578 = vmatprep.subr.bf16.mxu0 0
          %579 = vmatpush2.bf16.msra.mxu0 0
          %580 = vmatprep.subr.bf16.mxu0 0
          %581 = vmatpush2.bf16.msra.mxu0 0
          %582 = vmatprep.subr.bf16.mxu0 0
          %583 = vmatpush2.bf16.msra.mxu0 0
          %584 = vmatprep.subr.bf16.mxu0 0
          %585 = vmatpush2.bf16.msra.mxu0 0
          %586 = vmatprep.subr.bf16.mxu0 0
          %587 = vmatpush2.bf16.msra.mxu0 0
          %588 = vmatprep.mubr.bf16.mxu0 0
          %589 = vmatmul.mubr.bf16.gmra.mxu0 %v472
          %v590 = vpop.f32.mrf.mxu0
          %v591 = vadd.f32 %v542, %v590
          %v592 = vpop.f32.mrf.mxu0
          %v593 = vpop.f32.mrf.mxu0
          %v594 = vpop.f32.mrf.mxu0
          %595 = vdwg.mxu0
          %vm596 = vcmask 31744
          %v597 = vsel %vm596, %v591, 0.0
          %598 = vadd.xlane.f32.xlu0 %v597
          %v599 = vpop.xlane.xlu0 %598
          %v600 = vrcp.pop 4.0
          %v601 = vmul.f32 %v599, %v600
          %v602 = vsub.f32 %v591, %v601
          %v603 = vmul.f32 %v602, %v602
          %v604 = vsel %vm596, %v603, 0.0
          %605 = vadd.xlane.f32.xlu0 %v604
          %v606 = vpop.xlane.xlu0 %605
          %v607 = vmul.f32 %v606, %v600
          %v608 = vadd.f32 %v607, 1e-05
          %v609 = vrsqrt.pop %v608
          %v610 = vmul.f32 %v602, %v609
          %v612 = vlaneseq
          %v613 = vshrl.u32 %v612, 7
          %v614 = vsub.s32 0, %v613
          %v615 = vrot.slane %v526, %v614
          %v617 = vmul.f32 %v610, %v615
          %v619 = vlaneseq
          %v620 = vshrl.u32 %v619, 7
          %v621 = vsub.s32 0, %v620
          %v622 = vrot.slane %v527, %v621
          %v624 = vadd.f32 %v617, %v622
          %v625 = vpack.c.bf16 %v525, %v525
          %v626 = vld [vmem:[%s5] sm:$0xf]
          %v627 = vld [vmem:[%s5 + $0x4] sm:$0xf]
          %v628 = vld [vmem:[%s5 + $0x8] sm:$0xf]
          %v629 = vld [vmem:[%s5 + $0xc] sm:$0xf]
          %v630 = vld [vmem:[%s5 + $0x10] sm:$0xf]
          %v631 = vld [vmem:[%s5 + $0x14] sm:$0xf]
          %v632 = vld [vmem:[%s5 + $0x18] sm:$0xf]
          %v633 = vld [vmem:[%s5 + $0x1c] sm:$0xf]
          %v634 = vld [vmem:[%s6] sm:$0x1]
          %v636 = vlaneseq
          %v637 = vshrl.u32 %v636, 7
          %v638 = vsub.s32 0, %v637
          %v639 = vrot.slane %v634, %v638
          %642 = vrot.lane.b32.xlu0 %v625, 64
          %v643 = vpop.permute.xlu0 %642
          %v652 = vunpack.c.l.b16 %v626
          %v653 = vunpack.c.l.b16 %v627
          %v654 = vunpack.c.l.b16 %v628
          %v655 = vunpack.c.l.b16 %v629
          %v656 = vunpack.c.l.b16 %v630
          %v657 = vunpack.c.l.b16 %v631
          %v658 = vunpack.c.l.b16 %v632
          %v659 = vunpack.c.l.b16 %v633
          %v660 = vpack.c.b16 %v653, %v652
          %v661 = vpack.c.b16 %v655, %v654
          %v662 = vpack.c.b16 %v657, %v656
          %v663 = vpack.c.b16 %v659, %v658
          %vm668 = vcmask 523264
          %v670 = vsel %vm668, %v643, 0
          %672 = vmatprep.subr.bf16.mxu0 0
          %673 = vmatpush1.bf16.msra.mxu0 0
          %674 = vmatprep.subr.bf16.mxu0 0
          %675 = vmatpush1.bf16.msra.mxu0 0
          %676 = vmatprep.subr.bf16.mxu0 0
          %677 = vmatpush1.bf16.msra.mxu0 0
          %678 = vmatprep.subr.bf16.mxu0 0
          %679 = vmatpush1.bf16.msra.mxu0 0
          %680 = vmatprep.subr.bf16.mxu0 0
          %681 = vmatpush1.bf16.msra.mxu0 %v663
          %682 = vmatprep.subr.bf16.mxu0 0
          %683 = vmatpush1.bf16.msra.mxu0 %v662
          %684 = vmatprep.subr.bf16.mxu0 0
          %685 = vmatpush1.bf16.msra.mxu0 %v661
          %686 = vmatprep.subr.bf16.mxu0 0
          %687 = vmatpush1.bf16.msra.mxu0 %v660
          %688 = vmatprep.subr.bf16.mxu0 0
          %689 = vmatpush2.bf16.msra.mxu0 0
          %690 = vmatprep.subr.bf16.mxu0 0
          %691 = vmatpush2.bf16.msra.mxu0 0
          %692 = vmatprep.subr.bf16.mxu0 0
          %693 = vmatpush2.bf16.msra.mxu0 0
          %694 = vmatprep.subr.bf16.mxu0 0
          %695 = vmatpush2.bf16.msra.mxu0 0
          %696 = vmatprep.subr.bf16.mxu0 0
          %697 = vmatpush2.bf16.msra.mxu0 0
          %698 = vmatprep.subr.bf16.mxu0 0
          %699 = vmatpush2.bf16.msra.mxu0 0
          %700 = vmatprep.subr.bf16.mxu0 0
          %701 = vmatpush2.bf16.msra.mxu0 0
          %702 = vmatprep.subr.bf16.mxu0 0
          %703 = vmatpush2.bf16.msra.mxu0 0
          %704 = vmatprep.mubr.bf16.mxu0 0
          %705 = vmatmul.mubr.bf16.gmra.mxu0 %v670
          %v706 = vpop.f32.mrf.mxu0
          %v707 = vadd.f32 %v639, %v706
          %v708 = vpop.f32.mrf.mxu0
          %v709 = vpop.f32.mrf.mxu0
          %v710 = vpop.f32.mrf.mxu0
          %711 = vdwg.mxu0
          %v712 = vsel %vm596, %v707, 0.0
          %713 = vadd.xlane.f32.xlu0 %v712
          %v714 = vpop.xlane.xlu0 %713
          %v715 = vmul.f32 %v714, %v600
          %v716 = vsub.f32 %v707, %v715
          %v717 = vmul.f32 %v716, %v716
          %v718 = vsel %vm596, %v717, 0.0
          %719 = vadd.xlane.f32.xlu0 %v718
          %v720 = vpop.xlane.xlu0 %719
          %v721 = vmul.f32 %v720, %v600
          %v722 = vadd.f32 %v721, 1e-05
          %v723 = vrsqrt.pop %v722
          %v724 = vmul.f32 %v716, %v723
          %v725 = vmul.f32 %v724, %v615
          %v726 = vadd.f32 %v725, %v622
          %s727 = scalar_lea.vmem [#allocation2], %s528
          %728 = vst.msk [vmem:[%s727] sm:$0xff] %vm596, %v624
          %s729 = scalar_lea.vmem [#allocation3], %s528
          %730 = vst.msk [vmem:[%s729] sm:$0xff] %vm596, %v726
        $region72: #{tpu_custom_call.1} parent=67 // pred_fallthru
          _
        %p731 = scmp.eq.s32.totalorder %s32, 1
        // Predicated region
        $region73: #{tpu_custom_call.1} parent=67 // pred_check
          %p732 = pneg %p731
        $region74: #{tpu_custom_call.1} parent=67 // pred_check_branch
          %734 = sbr.rel (%p732) target = $region76
        $region75: #{tpu_custom_call.1} parent=67 // pred_region
          %s735 = scalar_lea.vmem [#allocation2], %s528
          %v736 = vld [vmem:[%s735] sm:$0xff]
          %v737 = vpack.c.bf16 %v736, %v736
          %v738 = vld [vmem:[#allocation2] sm:$0xff]
          %v739 = vpack.c.bf16 %v738, %v738
          %v740 = vld [vmem:[#allocation3] sm:$0xff]
          %v741 = vpack.c.bf16 %v740, %v740
          %vm742 = vcmask 31744
          %v744 = vsel %vm742, %v737, 0
          %v747 = vsel %vm742, %v741, 0
          %749 = vmatprep.subr.bf16.mxu0 0
          %750 = vmatpush1.bf16.xpose.msra.mxu0 0
          %751 = vmatprep.subr.bf16.mxu0 0
          %752 = vmatpush1.bf16.xpose.msra.mxu0 0
          %753 = vmatprep.subr.bf16.mxu0 0
          %754 = vmatpush1.bf16.xpose.msra.mxu0 0
          %755 = vmatprep.subr.bf16.mxu0 0
          %756 = vmatpush1.bf16.xpose.msra.mxu0 0
          %757 = vmatprep.subr.bf16.mxu0 0
          %758 = vmatpush1.bf16.xpose.msra.mxu0 0
          %759 = vmatprep.subr.bf16.mxu0 0
          %760 = vmatpush1.bf16.xpose.msra.mxu0 0
          %761 = vmatprep.subr.bf16.mxu0 0
          %762 = vmatpush1.bf16.xpose.msra.mxu0 0
          %763 = vmatprep.subr.bf16.mxu0 0
          %764 = vmatpush1.bf16.xpose.msra.mxu0 %v747
          %765 = vmatprep.subr.bf16.mxu0 0
          %766 = vmatpush2.bf16.xpose.msra.mxu0 0
          %767 = vmatprep.subr.bf16.mxu0 0
          %768 = vmatpush2.bf16.xpose.msra.mxu0 0
          %769 = vmatprep.subr.bf16.mxu0 0
          %770 = vmatpush2.bf16.xpose.msra.mxu0 0
          %771 = vmatprep.subr.bf16.mxu0 0
          %772 = vmatpush2.bf16.xpose.msra.mxu0 0
          %773 = vmatprep.subr.bf16.mxu0 0
          %774 = vmatpush2.bf16.xpose.msra.mxu0 0
          %775 = vmatprep.subr.bf16.mxu0 0
          %776 = vmatpush2.bf16.xpose.msra.mxu0 0
          %777 = vmatprep.subr.bf16.mxu0 0
          %778 = vmatpush2.bf16.xpose.msra.mxu0 0
          %779 = vmatprep.subr.bf16.mxu0 0
          %780 = vmatpush2.bf16.xpose.msra.mxu0 0
          %781 = vmatprep.mubr.bf16.mxu0 0
          %782 = vmatmul.mubr.bf16.gmra.mxu0 %v744
          %v783 = vpop.f32.mrf.mxu0
          %v784 = vadd.f32 0.0, %v783
          %v785 = vpop.f32.mrf.mxu0
          %v786 = vpop.f32.mrf.mxu0
          %v787 = vpop.f32.mrf.mxu0
          %788 = vdwg.mxu0
          %v789 = vmax.f32 %v784, -5.0
          %v790 = vmin.f32 %v789, 5.0
          %v791 = vxor.u32 %v790, 2147483648
          %v792 = vmul.f32 %v791, 1.442695
          %v793 = vpow.pop %v792
          %v794 = vadd.f32 %v793, 1.0
          %v795 = vrcp.pop %v794
          %v796 = vmul.f32 1.0, %v795
          %v797 = vmul.f32 %v790, %v796
          %v798 = vpack.c.bf16 %v797, %v797
          %vm799 = vcmask 64512
          %v801 = vsel %vm799, %v798, 0
          %vm803 = vcmask 1043456
          %v805 = vsel %vm803, %v739, 0
          %807 = vmatprep.subr.bf16.mxu0 0
          %808 = vmatpush1.bf16.msra.mxu0 0
          %809 = vmatprep.subr.bf16.mxu0 0
          %810 = vmatpush1.bf16.msra.mxu0 0
          %811 = vmatprep.subr.bf16.mxu0 0
          %812 = vmatpush1.bf16.msra.mxu0 0
          %813 = vmatprep.subr.bf16.mxu0 0
          %814 = vmatpush1.bf16.msra.mxu0 0
          %815 = vmatprep.subr.bf16.mxu0 0
          %816 = vmatpush1.bf16.msra.mxu0 0
          %817 = vmatprep.subr.bf16.mxu0 0
          %818 = vmatpush1.bf16.msra.mxu0 0
          %819 = vmatprep.subr.bf16.mxu0 0
          %820 = vmatpush1.bf16.msra.mxu0 0
          %821 = vmatprep.subr.bf16.mxu0 0
          %822 = vmatpush1.bf16.msra.mxu0 %v805
          %823 = vmatprep.subr.bf16.mxu0 0
          %824 = vmatpush2.bf16.msra.mxu0 0
          %825 = vmatprep.subr.bf16.mxu0 0
          %826 = vmatpush2.bf16.msra.mxu0 0
          %827 = vmatprep.subr.bf16.mxu0 0
          %828 = vmatpush2.bf16.msra.mxu0 0
          %829 = vmatprep.subr.bf16.mxu0 0
          %830 = vmatpush2.bf16.msra.mxu0 0
          %831 = vmatprep.subr.bf16.mxu0 0
          %832 = vmatpush2.bf16.msra.mxu0 0
          %833 = vmatprep.subr.bf16.mxu0 0
          %834 = vmatpush2.bf16.msra.mxu0 0
          %835 = vmatprep.subr.bf16.mxu0 0
          %836 = vmatpush2.bf16.msra.mxu0 0
          %837 = vmatprep.subr.bf16.mxu0 0
          %838 = vmatpush2.bf16.msra.mxu0 0
          %839 = vmatprep.mubr.bf16.mxu0 0
          %840 = vmatmul.mubr.bf16.gmra.mxu0 %v801
          %v841 = vpop.f32.mrf.mxu0
          %v842 = vadd.f32 0.0, %v841
          %v843 = vpop.f32.mrf.mxu0
          %v844 = vpop.f32.mrf.mxu0
          %v845 = vpop.f32.mrf.mxu0
          %846 = vdwg.mxu0
          %v847 = vpack.c.bf16 %v842, %v842
          %v848 = vld [vmem:[%s9] sm:$0x3]
          %v850 = vsel %vm742, %v847, 0
          %vm852 = vcmask 1041408
          %v854 = vsel %vm852, %v848, 0
          %856 = vmatprep.subr.bf16.mxu0 0
          %857 = vmatpush1.bf16.msra.mxu0 0
          %858 = vmatprep.subr.bf16.mxu0 0
          %859 = vmatpush1.bf16.msra.mxu0 0
          %860 = vmatprep.subr.bf16.mxu0 0
          %861 = vmatpush1.bf16.msra.mxu0 0
          %862 = vmatprep.subr.bf16.mxu0 0
          %863 = vmatpush1.bf16.msra.mxu0 0
          %864 = vmatprep.subr.bf16.mxu0 0
          %865 = vmatpush1.bf16.msra.mxu0 0
          %866 = vmatprep.subr.bf16.mxu0 0
          %867 = vmatpush1.bf16.msra.mxu0 0
          %868 = vmatprep.subr.bf16.mxu0 0
          %869 = vmatpush1.bf16.msra.mxu0 0
          %870 = vmatprep.subr.bf16.mxu0 0
          %871 = vmatpush1.bf16.msra.mxu0 %v854
          %872 = vmatprep.subr.bf16.mxu0 0
          %873 = vmatpush2.bf16.msra.mxu0 0
          %874 = vmatprep.subr.bf16.mxu0 0
          %875 = vmatpush2.bf16.msra.mxu0 0
          %876 = vmatprep.subr.bf16.mxu0 0
          %877 = vmatpush2.bf16.msra.mxu0 0
          %878 = vmatprep.subr.bf16.mxu0 0
          %879 = vmatpush2.bf16.msra.mxu0 0
          %880 = vmatprep.subr.bf16.mxu0 0
          %881 = vmatpush2.bf16.msra.mxu0 0
          %882 = vmatprep.subr.bf16.mxu0 0
          %883 = vmatpush2.bf16.msra.mxu0 0
          %884 = vmatprep.subr.bf16.mxu0 0
          %885 = vmatpush2.bf16.msra.mxu0 0
          %886 = vmatprep.subr.bf16.mxu0 0
          %887 = vmatpush2.bf16.msra.mxu0 0
          %888 = vmatprep.mubr.bf16.mxu0 0
          %889 = vmatmul.mubr.bf16.gmra.mxu0 %v850
          %v890 = vpop.f32.mrf.mxu0
          %v891 = vadd.f32 0.0, %v890
          %v892 = vpop.f32.mrf.mxu0
          %v893 = vpop.f32.mrf.mxu0
          %v894 = vpop.f32.mrf.mxu0
          %895 = vdwg.mxu0
          %v896 = vmul.f32 %v891, 0.1
          %898 = vrot.lane.b32.xlu0 %v896, 64
          %v899 = vpop.permute.xlu0 %898
          %v901 = vadd.f32 %v525, %v899
          %v902 = vpack.c.bf16 %v901, %v901
          %v903 = vld [vmem:[%s10] sm:$0xf]
          %v904 = vld [vmem:[%s10 + $0x4] sm:$0xf]
          %v905 = vld [vmem:[%s10 + $0x8] sm:$0xf]
          %v906 = vld [vmem:[%s10 + $0xc] sm:$0xf]
          %v907 = vld [vmem:[%s10 + $0x10] sm:$0xf]
          %v908 = vld [vmem:[%s10 + $0x14] sm:$0xf]
          %v909 = vld [vmem:[%s10 + $0x18] sm:$0xf]
          %v910 = vld [vmem:[%s10 + $0x1c] sm:$0xf]
          %v911 = vld [vmem:[%s11] sm:$0x1]
          %v913 = vlaneseq
          %v914 = vshrl.u32 %v913, 7
          %v915 = vsub.s32 0, %v914
          %v916 = vrot.slane %v911, %v915
          %919 = vrot.lane.b32.xlu0 %v902, 64
          %v920 = vpop.permute.xlu0 %919
          %v929 = vunpack.c.l.b16 %v903
          %v930 = vunpack.c.l.b16 %v904
          %v931 = vunpack.c.l.b16 %v905
          %v932 = vunpack.c.l.b16 %v906
          %v933 = vunpack.c.l.b16 %v907
          %v934 = vunpack.c.l.b16 %v908
          %v935 = vunpack.c.l.b16 %v909
          %v936 = vunpack.c.l.b16 %v910
          %v937 = vpack.c.b16 %v930, %v929
          %v938 = vpack.c.b16 %v932, %v931
          %v939 = vpack.c.b16 %v934, %v933
          %v940 = vpack.c.b16 %v936, %v935
          %vm945 = vcmask 523264
          %v947 = vsel %vm945, %v920, 0
          %949 = vmatprep.subr.bf16.mxu0 0
          %950 = vmatpush1.bf16.msra.mxu0 0
          %951 = vmatprep.subr.bf16.mxu0 0
          %952 = vmatpush1.bf16.msra.mxu0 0
          %953 = vmatprep.subr.bf16.mxu0 0
          %954 = vmatpush1.bf16.msra.mxu0 0
          %955 = vmatprep.subr.bf16.mxu0 0
          %956 = vmatpush1.bf16.msra.mxu0 0
          %957 = vmatprep.subr.bf16.mxu0 0
          %958 = vmatpush1.bf16.msra.mxu0 %v940
          %959 = vmatprep.subr.bf16.mxu0 0
          %960 = vmatpush1.bf16.msra.mxu0 %v939
          %961 = vmatprep.subr.bf16.mxu0 0
          %962 = vmatpush1.bf16.msra.mxu0 %v938
          %963 = vmatprep.subr.bf16.mxu0 0
          %964 = vmatpush1.bf16.msra.mxu0 %v937
          %965 = vmatprep.subr.bf16.mxu0 0
          %966 = vmatpush2.bf16.msra.mxu0 0
          %967 = vmatprep.subr.bf16.mxu0 0
          %968 = vmatpush2.bf16.msra.mxu0 0
          %969 = vmatprep.subr.bf16.mxu0 0
          %970 = vmatpush2.bf16.msra.mxu0 0
          %971 = vmatprep.subr.bf16.mxu0 0
          %972 = vmatpush2.bf16.msra.mxu0 0
          %973 = vmatprep.subr.bf16.mxu0 0
          %974 = vmatpush2.bf16.msra.mxu0 0
          %975 = vmatprep.subr.bf16.mxu0 0
          %976 = vmatpush2.bf16.msra.mxu0 0
          %977 = vmatprep.subr.bf16.mxu0 0
          %978 = vmatpush2.bf16.msra.mxu0 0
          %979 = vmatprep.subr.bf16.mxu0 0
          %980 = vmatpush2.bf16.msra.mxu0 0
          %981 = vmatprep.mubr.bf16.mxu0 0
          %982 = vmatmul.mubr.bf16.gmra.mxu0 %v947
          %v983 = vpop.f32.mrf.mxu0
          %v984 = vadd.f32 %v916, %v983
          %v985 = vpop.f32.mrf.mxu0
          %v986 = vpop.f32.mrf.mxu0
          %v987 = vpop.f32.mrf.mxu0
          %988 = vdwg.mxu0
          %989 = vst.msk [vmem:[%s435] sm:$0xff] %vm470, %v984
        $region76: #{tpu_custom_call.1} parent=67 // pred_fallthru
          _
        %s990 = sand.u32 %s316, 1
        %s991 = scalar_lea.sflag [#allocation5], %s990
        %s992 = sand.u32 %s316, 1
        %s993 = smul.addr %s992, 8
        %s994 = scalar_lea.vmem [#allocation4], %s993
        // Predicated region
        $region77: #{tpu_custom_call.1} parent=67 // pred_check
          %p995 = pneg %p326
        $region78: #{tpu_custom_call.1} parent=67 // pred_check_branch
          %997 = sbr.rel (%p995) target = $region80
        $region79: #{tpu_custom_call.1} parent=67 // pred_region
          %s998 = smul.u32 %s33, %s32
          %s1000 = ssub.s32 128, 128
          %1001 = vsyncadd %s991, %s1000
          %s1002 = sadd.s32 %s998, %s31
          %s1003 = smul.addr %s1002, 128
          %s1004 = scalar_lea.hbm %s12, %s1003
          %s1006 = sshll.u32 %s994, 4
          %s1007 = int_to_ptr.vmem [resolvable:$true] %s1006
          %1009 = dma.vmem_to_hbm [thread:$0]  %s1007, 128, %s1004, %s991
        $region80: #{tpu_custom_call.1} parent=67 // pred_fallthru
          _
      $region68: #{tpu_custom_call.1} parent=5 // pred_fallthru
        _
      %p1010 = scmp.le.s32.totalorder 2, %s21
      // Predicated region
      $region81: #{tpu_custom_call.1} parent=5 // pred_check
        %p1011 = pneg %p1010
      $region82: #{tpu_custom_call.1} parent=5 // pred_check_branch
        %1013 = sbr.rel (%p1011) target = $region84
      $region83: #{tpu_custom_call.1} parent=5 // pred_region
        %s1014 = ssub.s32 %s21, 2
        // Predicated region
        $region85: #{tpu_custom_call.1} parent=83 // pred_check
          %p1015 = pneg %p332
        $region86: #{tpu_custom_call.1} parent=83 // pred_check_branch
          %1017 = sbr.rel (%p1015) target = $region88
        $region87: #{tpu_custom_call.1} parent=83 // pred_region
          %s1018 = sand.u32 %s317, 1
          %s1019 = scalar_lea.sflag [#allocation5], %s1018
          %s1020 = sand.u32 %s317, 1
          %s1021 = smul.addr %s1020, 8
          %s1022 = scalar_lea.vmem [#allocation4], %s1021
          %1023 = dma.done %s1019, 128
        $region88: #{tpu_custom_call.1} parent=83 // pred_fallthru
          _
      $region84: #{tpu_custom_call.1} parent=5 // pred_fallthru
        _
    $region6: #{tpu_custom_call.1} parent=1 // loop_footer
      %s25 = sadd.s32 1, %s21
    $region7: #{tpu_custom_call.1} parent=1 // loop_footer_branch
      %20 = sbr.rel target = $region3
    $region8: #{tpu_custom_call.1} parent=1 // loop_exit
      _
    %1024 = vsyncpa [#allocation5], 1
    %s1025 = scalar_lea.sflag [#allocation5], 1
    %1026 = vsyncpa %s1025, 1

</llo_original>
